<compile_context>
chip_gen: v6e
topology: v6e:2x2x1
jax: 0.10.0
libtpu: 0.0.40
codegen_flags: <defaults>
</compile_context>

<pallas_src>
import functools

import jax
import jax.numpy as jnp
from jax.experimental import pallas as pl
from jax.experimental.pallas import tpu as pltpu


_PANEL_BUDGET_BYTES = 16 * 1024 * 1024  # combined e_chunk + accumulator (f32)


def atten_kernel(x1_ref, x2_ref, wq_ref, bq_ref, wkv_ref, bkv_ref, gamma_ref,
                 out_ref, *, j_chunk, matmul_dtype):
    bt, F = out_ref.shape

    x1 = x1_ref[...]
    x2 = x2_ref[...]
    wq = wq_ref[...]
    wkv = wkv_ref[...]
    if matmul_dtype != jnp.float32:
        # bf16 MXU path (v6e/v7x production default); f32 accumulation.
        x1, x2 = x1.astype(matmul_dtype), x2.astype(matmul_dtype)
        wq, wkv = wq.astype(matmul_dtype), wkv.astype(matmul_dtype)

    # Projections (MXU).  K and V share input x2 -> one packed (F, 2F) weight:
    # a single matmul / bias-add / ReLU and a single resident weight block.
    q = jnp.maximum(
        jnp.dot(x1, wq, preferred_element_type=jnp.float32) + bq_ref[...], 0.0)
    kv = jnp.maximum(
        jnp.dot(x2, wkv, preferred_element_type=jnp.float32) + bkv_ref[...], 0.0)
    k = kv[:, :F]
    v = kv[:, F:]

    # energy[b,i,j] = q[b,i] * k[b,j]; softmax is over the query axis i.
    # NOTE: q, k >= 0 post-ReLU  =>  max_i q[b,i]*k[b,j] = (max_i q[b,i])*k[b,j],
    # so the numerically-stabilizing max is an O(bt*F) reduce, never panel-sized.
    qmax = jnp.max(q, axis=-1, keepdims=True)          # (bt, 1)
    qs = (q - qmax)[:, :, None]                        # (bt, F, 1)  hoisted
    gamma = gamma_ref[0]                               # SMEM scalar, read once

    # Key-axis chunking: bound the live panel to (bt, F, jc); accumulate the
    # per-chunk contribution element-wise and reduce across lanes once at end.
    n_chunks = F // j_chunk
    acc = None
    for c in range(n_chunks):                          # static trip count/slices
        lo = c * j_chunk
        k_c = k[:, lo:lo + j_chunk]                    # (bt, jc)
        e_c = jnp.exp(qs * k_c[:, None, :])            # (bt, F, jc)  EUP
        s_c = jnp.sum(e_c, axis=1)                     # (bt, jc)  softmax denom
        vs_c = v[:, lo:lo + j_chunk] * (gamma / s_c)   # exact reciprocal (review)
        contrib = e_c * vs_c[:, None, :]               # (bt, F, jc)  VPU
        acc = contrib if acc is None else acc + contrib
    # out[b,i] = sum_j e[b,i,j] * v[b,j] * gamma / s[b,j]   (single XLU reduce)
    out_ref[...] = jnp.sum(acc, axis=-1)


def _pick_batch_tile(B: int, F: int) -> int:
    """Batch tile: large enough to fill the MXU M dim (up to 256), small enough
    that (a) the grid has >=2 steps when B allows it (both TCs on v7x) and
    (b) the (bt, F, jc) exp panels stay inside the panel budget at jc>=128."""
    if B % 8 != 0:
        return B                       # block must equal full dim if not 8-divisible
    cap = 256
    if B >= 16:
        cap = min(cap, B // 2)         # guarantee >=2 grid steps
    cap = min(cap, max(8, _PANEL_BUDGET_BYTES // (2 * 4 * F * min(F, 128))))
    bt = 8
    while bt * 2 <= cap and B % (bt * 2) == 0:
        bt *= 2
    return bt


def _pick_key_chunk(F: int, bt: int) -> int:
    """Largest j-chunk (<=512 lanes) dividing F with both f32 working panels
    (e_chunk + accumulator, each (bt, F, jc)) inside the panel budget."""
    jc = F
    while jc % 2 == 0 and jc > 8 and (
            jc > 512 or 2 * 4 * bt * F * jc > _PANEL_BUDGET_BYTES):
        jc //= 2
    return jc


@functools.lru_cache(maxsize=None)
def _vmem_limit_bytes() -> int:
    """Generation-aware scoped-VMEM budget: ~75% of physical VMEM
    (~96 MiB on v5e/v6e with 128 MiB, ~48 MiB on v7x with 64 MiB)."""
    try:
        cap = pltpu.get_tpu_info().vmem_capacity_bytes
    except Exception:                  # query unavailable -> safe on all gens
        cap = 64 * 1024 * 1024
    return int(min(max(cap * 3 // 4, 32 * 1024 * 1024), 100 * 1024 * 1024))


def pack_kv_params(wk, bk, wv, bv):
    """Pack K|V weights/biases ONCE at parameter init (outside the jitted
    forward), so there is no per-call concatenate / extra HBM copy."""
    return jnp.concatenate([wk, wv], axis=1), jnp.concatenate([bk, bv], axis=1)


@functools.partial(jax.jit, static_argnames=("b_tile", "j_chunk", "matmul_dtype"))
def atten_forward(x1, x2, wq, bq, wkv, bkv, gamma, *, b_tile=None, j_chunk=None,
                  matmul_dtype=jnp.float32):
    B, F = x1.shape
    bt = b_tile if b_tile is not None else _pick_batch_tile(B, F)
    assert B % bt == 0, "batch tile must divide batch"
    jc = j_chunk if j_chunk is not None else _pick_key_chunk(F, bt)
    assert F % jc == 0, "key chunk must divide the feature dim"

    resident = lambda i: (0, 0)        # constant index map: weights stay resident
    kernel = functools.partial(atten_kernel, j_chunk=jc, matmul_dtype=matmul_dtype)
    return pl.pallas_call(
        kernel,
        out_shape=jax.ShapeDtypeStruct((B, F), jnp.float32),
        grid=(B // bt,),
        in_specs=[
            pl.BlockSpec((bt, F), lambda i: (i, 0)),             # x1 tile
            pl.BlockSpec((bt, F), lambda i: (i, 0)),             # x2 tile
            pl.BlockSpec((F, F), resident),                      # Wq
            pl.BlockSpec((1, F), resident),                      # bq
            pl.BlockSpec((F, 2 * F), resident),                  # Wk | Wv
            pl.BlockSpec((1, 2 * F), resident),                  # bk | bv
            pl.BlockSpec(memory_space=pltpu.MemorySpace.SMEM),   # gamma scalar
        ],
        out_specs=pl.BlockSpec((bt, F), lambda i: (i, 0)),
        compiler_params=pltpu.CompilerParams(
            dimension_semantics=("parallel",),
            vmem_limit_bytes=_vmem_limit_bytes(),
        ),
    )(x1, x2, wq, bq, wkv, bkv, gamma)


def ref_forward(x1, x2, wq, bq, wk, bk, wv, bv, gamma):
    q = jax.nn.relu(x1 @ wq + bq)
    k = jax.nn.relu(x2 @ wk + bk)
    v = jax.nn.relu(x2 @ wv + bv)
    energy = jnp.einsum('bi,bj->bij', q, k)          # energy[b,i,j] = q_i * k_j
    attn = jax.nn.softmax(energy, axis=1)            # softmax over the query axis
    out = jnp.einsum('bj,bij->bi', v, attn)          # out[b,i] = sum_j v_j attn[b,i,j]
    return out * gamma[0]


def make_inputs(key, B, F):
    ks = jax.random.split(key, 8)
    std = (2.0 / (F + F)) ** 0.5                     # xavier_normal-style scale
    x1 = jax.random.normal(ks[0], (B, F), jnp.float32)
    x2 = jax.random.normal(ks[1], (B, F), jnp.float32)
    wq = std * jax.random.normal(ks[2], (F, F), jnp.float32)
    wk = std * jax.random.normal(ks[3], (F, F), jnp.float32)
    wv = std * jax.random.normal(ks[4], (F, F), jnp.float32)
    bq = 0.01 * jax.random.normal(ks[5], (1, F), jnp.float32)
    bk = 0.01 * jax.random.normal(ks[6], (1, F), jnp.float32)
    bv = 0.01 * jax.random.normal(ks[7], (1, F), jnp.float32)
    gamma = jnp.array([6.0], jnp.float32)
    return x1, x2, wq, bq, wk, bk, wv, bv, gamma


if __name__ == "__main__":
    k1, k2 = jax.random.split(jax.random.PRNGKey(0))

    # 1) Small shape matching the module's 2-D (batch, features) input.
    x1, x2, wq, bq, wk, bk, wv, bv, gamma = make_inputs(k1, 2, 32)
    wkv, bkv = pack_kv_params(wk, bk, wv, bv)
    out = jax.block_until_ready(atten_forward(x1, x2, wq, bq, wkv, bkv, gamma))
    ref = ref_forward(x1, x2, wq, bq, wk, bk, wv, bv, gamma)
    assert out.shape == ref.shape
    assert jnp.allclose(out, ref, atol=1e-3, rtol=1e-3), "f32 mismatch vs reference"

    # 2) Larger shape: auto tiling (bt=16 -> 2 parallel grid steps, jc=128).
    x1, x2, wq, bq, wk, bk, wv, bv, gamma = make_inputs(k2, 32, 128)
    wkv, bkv = pack_kv_params(wk, bk, wv, bv)
    out = jax.block_until_ready(atten_forward(x1, x2, wq, bq, wkv, bkv, gamma))
    ref = ref_forward(x1, x2, wq, bq, wk, bk, wv, bv, gamma)
    assert jnp.allclose(out, ref, atol=1e-3, rtol=1e-3), "f32 mismatch vs reference"

    # 3) Explicit small tiles: exercises the multi-chunk key loop (4 chunks)
    #    and a 4-step pipelined grid.
    out = jax.block_until_ready(
        atten_forward(x1, x2, wq, bq, wkv, bkv, gamma, b_tile=8, j_chunk=32))
    assert jnp.allclose(out, ref, atol=1e-3, rtol=1e-3), "chunked mismatch vs reference"

    # 4) bf16 MXU path (production default for v6e/v7x); loose tolerance.
    out16 = jax.block_until_ready(
        atten_forward(x1, x2, wq, bq, wkv, bkv, gamma, matmul_dtype=jnp.bfloat16))
    assert jnp.allclose(out16, ref, atol=1e-1, rtol=1e-1), "bf16 mismatch vs reference"

    print("KERNEL_OK")
</pallas_src>

<mosaic_0001>
module attributes {stable_mosaic.version = 11 : i64} {
  func.func @atten_kernel(%arg0: i32, %arg1: memref<2x32xf32, #tpu.memory_space<vmem>>, %arg2: memref<2x32xf32, #tpu.memory_space<vmem>>, %arg3: memref<32x32xf32, #tpu.memory_space<vmem>>, %arg4: memref<1x32xf32, #tpu.memory_space<vmem>>, %arg5: memref<32x64xf32, #tpu.memory_space<vmem>>, %arg6: memref<1x64xf32, #tpu.memory_space<vmem>>, %arg7: memref<1xf32, #tpu.memory_space<smem>>, %arg8: memref<2x32xf32, #tpu.memory_space<vmem>>) attributes {dimension_semantics = [#tpu.dimension_semantics<parallel>], iteration_bounds = array<i64: 1>, scalar_prefetch = 0 : i64, scratch_operands = 0 : i64, tpu.core_type = #tpu.core_type<tc>, window_params = [{transform_indices = @transform_0, window_bounds = array<i64: 2, 32>}, {transform_indices = @transform_1, window_bounds = array<i64: 2, 32>}, {pipeline_mode = #tpu.pipeline_mode<synchronous>, transform_indices = @transform_2, window_bounds = array<i64: 32, 32>}, {pipeline_mode = #tpu.pipeline_mode<synchronous>, transform_indices = @transform_3, window_bounds = array<i64: 1, 32>}, {pipeline_mode = #tpu.pipeline_mode<synchronous>, transform_indices = @transform_4, window_bounds = array<i64: 32, 64>}, {pipeline_mode = #tpu.pipeline_mode<synchronous>, transform_indices = @transform_5, window_bounds = array<i64: 1, 64>}, {transform_indices = @transform_6, window_bounds = array<i64: 1>}, {transform_indices = @transform_7, window_bounds = array<i64: 2, 32>}]} {
    %c0 = arith.constant 0 : index
    %c0_0 = arith.constant 0 : index
    %0 = vector.load %arg1[%c0, %c0_0] : memref<2x32xf32, #tpu.memory_space<vmem>>, vector<2x32xf32>
    %c0_1 = arith.constant 0 : index
    %c0_2 = arith.constant 0 : index
    %1 = vector.load %arg2[%c0_1, %c0_2] : memref<2x32xf32, #tpu.memory_space<vmem>>, vector<2x32xf32>
    %c0_3 = arith.constant 0 : index
    %c0_4 = arith.constant 0 : index
    %2 = vector.load %arg3[%c0_3, %c0_4] : memref<32x32xf32, #tpu.memory_space<vmem>>, vector<32x32xf32>
    %c0_5 = arith.constant 0 : index
    %c0_6 = arith.constant 0 : index
    %3 = vector.load %arg5[%c0_5, %c0_6] : memref<32x64xf32, #tpu.memory_space<vmem>>, vector<32x64xf32>
    %cst = arith.constant dense<0.000000e+00> : vector<2x32xf32>
    %4 = tpu.matmul %0, %2, %cst {dimension_numbers = #tpu.dot_dimension_numbers<[1], [0], [0], [1], [0, 0, 1, 1], [], []>} : vector<2x32xf32>, vector<32x32xf32>, vector<2x32xf32> -> vector<2x32xf32>
    %c0_7 = arith.constant 0 : index
    %c0_8 = arith.constant 0 : index
    %5 = vector.load %arg4[%c0_7, %c0_8] : memref<1x32xf32, #tpu.memory_space<vmem>>, vector<1x32xf32>
    %6 = vector.broadcast %5 : vector<1x32xf32> to vector<2x32xf32>
    %7 = arith.addf %4, %6 : vector<2x32xf32>
    %cst_9 = arith.constant 0.000000e+00 : f32
    %8 = vector.broadcast %cst_9 : f32 to vector<2x32xf32>
    %9 = arith.maximumf %7, %8 : vector<2x32xf32>
    %cst_10 = arith.constant dense<0.000000e+00> : vector<2x64xf32>
    %10 = tpu.matmul %1, %3, %cst_10 {dimension_numbers = #tpu.dot_dimension_numbers<[1], [0], [0], [1], [0, 0, 1, 1], [], []>} : vector<2x32xf32>, vector<32x64xf32>, vector<2x64xf32> -> vector<2x64xf32>
    %c0_11 = arith.constant 0 : index
    %c0_12 = arith.constant 0 : index
    %11 = vector.load %arg6[%c0_11, %c0_12] : memref<1x64xf32, #tpu.memory_space<vmem>>, vector<1x64xf32>
    %12 = vector.broadcast %11 : vector<1x64xf32> to vector<2x64xf32>
    %13 = arith.addf %10, %12 : vector<2x64xf32>
    %cst_13 = arith.constant 0.000000e+00 : f32
    %14 = vector.broadcast %cst_13 : f32 to vector<2x64xf32>
    %15 = arith.maximumf %13, %14 : vector<2x64xf32>
    %16 = vector.extract_strided_slice %15 {offsets = [0, 0], sizes = [2, 32], strides = [1, 1]} : vector<2x64xf32> to vector<2x32xf32>
    %17 = vector.extract_strided_slice %15 {offsets = [0, 32], sizes = [2, 32], strides = [1, 1]} : vector<2x64xf32> to vector<2x32xf32>
    %cst_14 = arith.constant dense<0xFF800000> : vector<2xf32>
    %18 = vector.multi_reduction <maximumf>, %9, %cst_14 [1] : vector<2x32xf32> to vector<2xf32>
    %19 = vector.shape_cast %18 : vector<2xf32> to vector<2x1xf32>
    %20 = vector.broadcast %19 : vector<2x1xf32> to vector<2x32xf32>
    %21 = arith.subf %9, %20 : vector<2x32xf32>
    %22 = vector.shape_cast %21 : vector<2x32xf32> to vector<2x32x1xf32>
    %c0_15 = arith.constant 0 : index
    %23 = memref.load %arg7[%c0_15] : memref<1xf32, #tpu.memory_space<smem>>
    %24 = vector.shape_cast %16 : vector<2x32xf32> to vector<2x1x32xf32>
    %25 = vector.broadcast %22 : vector<2x32x1xf32> to vector<2x32x32xf32>
    %26 = vector.broadcast %24 : vector<2x1x32xf32> to vector<2x32x32xf32>
    %27 = arith.mulf %25, %26 : vector<2x32x32xf32>
    %28 = math.exp %27 : vector<2x32x32xf32>
    %cst_16 = arith.constant dense<0.000000e+00> : vector<2x32xf32>
    %29 = vector.multi_reduction <add>, %28, %cst_16 [1] : vector<2x32x32xf32> to vector<2x32xf32>
    %30 = vector.broadcast %23 : f32 to vector<2x32xf32>
    %31 = arith.divf %30, %29 : vector<2x32xf32>
    %32 = arith.mulf %17, %31 : vector<2x32xf32>
    %33 = vector.shape_cast %32 : vector<2x32xf32> to vector<2x1x32xf32>
    %34 = vector.broadcast %33 : vector<2x1x32xf32> to vector<2x32x32xf32>
    %35 = arith.mulf %28, %34 : vector<2x32x32xf32>
    %cst_17 = arith.constant dense<0.000000e+00> : vector<2x32xf32>
    %36 = vector.multi_reduction <add>, %35, %cst_17 [2] : vector<2x32x32xf32> to vector<2x32xf32>
    %c0_18 = arith.constant 0 : index
    %c0_19 = arith.constant 0 : index
    %37 = vector.load %arg8[%c0_18, %c0_19] : memref<2x32xf32, #tpu.memory_space<vmem>>, vector<2x32xf32>
    tpu.vector_store %arg8[%c0_18, %c0_19], %36 {strides = array<i32>} : memref<2x32xf32, #tpu.memory_space<vmem>>, vector<2x32xf32>,
    return
  }
  func.func @transform_0(%arg0: i32) -> (i32, i32) {
    %c0_i32 = arith.constant 0 : i32
    %c0_i32_0 = arith.constant 0 : i32
    return %arg0, %c0_i32 : i32, i32
  }
  func.func @transform_1(%arg0: i32) -> (i32, i32) {
    %c0_i32 = arith.constant 0 : i32
    %c0_i32_0 = arith.constant 0 : i32
    return %arg0, %c0_i32 : i32, i32
  }
  func.func @transform_2(%arg0: i32) -> (i32, i32) {
    %c0_i32 = arith.constant 0 : i32
    %c0_i32_0 = arith.constant 0 : i32
    %c0_i32_1 = arith.constant 0 : i32
    return %c0_i32, %c0_i32_0 : i32, i32
  }
  func.func @transform_3(%arg0: i32) -> (i32, i32) {
    %c0_i32 = arith.constant 0 : i32
    %c0_i32_0 = arith.constant 0 : i32
    %c0_i32_1 = arith.constant 0 : i32
    return %c0_i32, %c0_i32_0 : i32, i32
  }
  func.func @transform_4(%arg0: i32) -> (i32, i32) {
    %c0_i32 = arith.constant 0 : i32
    %c0_i32_0 = arith.constant 0 : i32
    %c0_i32_1 = arith.constant 0 : i32
    return %c0_i32, %c0_i32_0 : i32, i32
  }
  func.func @transform_5(%arg0: i32) -> (i32, i32) {
    %c0_i32 = arith.constant 0 : i32
    %c0_i32_0 = arith.constant 0 : i32
    %c0_i32_1 = arith.constant 0 : i32
    return %c0_i32, %c0_i32_0 : i32, i32
  }
  func.func @transform_6(%arg0: i32) -> i32 {
    %c0_i32 = arith.constant 0 : i32
    %c0_i32_0 = arith.constant 0 : i32
    return %c0_i32 : i32
  }
  func.func @transform_7(%arg0: i32) -> (i32, i32) {
    %c0_i32 = arith.constant 0 : i32
    %c0_i32_0 = arith.constant 0 : i32
    return %arg0, %c0_i32 : i32, i32
  }
}

</mosaic_0001>

<llo_original>
// kernel: atten_forward.1
$region0: #{atten_forward.1}
  #allocation0 [shape = 'u32[]', space=smem, size = 0x4, offset = 0x4, fixed_abs, tag = 'smem constant byte address 0x4 - core index']
  #allocation1 [shape = 'u32[144,128]{1,0:T(1,128)}', space=vmem, size = 0x12000, scoped, tag = 'internal scratch']
  #allocation2 [shape = 'f32[1]{0:T(128)S(6)}', space=smem, size = 0x200, scoped, tag = 'scoped memory for atten_forward.1']
  %s0 = inlined_call_operand.vmem [shape: f32[2,32], index: 0, kind: input, shape index: {}]
  %s1 = inlined_call_operand.hbm [shape: f32[2,32], index: 1, kind: input, shape index: {}]
  %s2 = inlined_call_operand.hbm [shape: f32[32,32], index: 2, kind: input, shape index: {}]
  %s3 = inlined_call_operand.vmem [shape: f32[1,32], index: 3, kind: input, shape index: {}]
  %s4 = inlined_call_operand.hbm [shape: f32[32,64], index: 4, kind: input, shape index: {}]
  %s5 = inlined_call_operand.vmem [shape: f32[1,64], index: 5, kind: input, shape index: {}]
  %s6 = inlined_call_operand.<no memory space> [shape: f32[1], index: 6, kind: input, shape index: {}]
  %s7 = inlined_call_operand.hbm [shape: f32[2,32], index: 7, kind: output, shape index: {}]
  %s8 = sld [smem:[#allocation0]]
  $region50: #{atten_forward.1} parent=0
    _
  %s10 = ssub.s32 1, %s8
  %s11 = scalar_select 0, %s10, %s8
  %12 = sst [smem:[#allocation2]] %s6
  $region1: #{atten_forward.1} parent=0
    #allocation3 [shape = 'u8[1024]{0}', space=vmem, size = 0x400, scoped, tag = 'input window, operand 1, single buffered']
    #allocation4 [shape = 's32[1]{0}', space=sflag, size = 0x4, scoped, tag = 'scoped memory for atten_forward.1']
    #allocation5 [shape = 's32[1]{0}', space=sflag, size = 0x4, scoped, tag = 'scoped memory for atten_forward.1']
    #allocation6 [shape = 'u8[16384]{0}', space=vmem, size = 0x4000, scoped, tag = 'input window, operand 2, single buffered']
    #allocation7 [shape = 's32[1]{0}', space=sflag, size = 0x4, scoped, tag = 'scoped memory for atten_forward.1']
    #allocation8 [shape = 'u8[16384]{0}', space=vmem, size = 0x4000, scoped, tag = 'input window, operand 4, single buffered']
    #allocation9 [shape = 'u8[1024]{0}', space=vmem, size = 0x400, scoped, tag = 'output window, operand 0, single buffered']
    %13 = vsyncpa [#allocation4], 0
    %14 = vsyncpa [#allocation7], 0
    %15 = vsyncpa [#allocation5], 0
    // Predicated region
    $region2: #{atten_forward.1} parent=1 // pred_check
      _
    $region3: #{atten_forward.1} parent=1 // pred_check_branch
      %17 = sbr.rel (0) target = $region5
    $region4: #{atten_forward.1} parent=1 // pred_region
      _
    $region5: #{atten_forward.1} parent=1 // pred_fallthru
      _
    // Predicated region
    $region6: #{atten_forward.1} parent=1 // pred_check
      _
    $region7: #{atten_forward.1} parent=1 // pred_check_branch
      %19 = sbr.rel (0) target = $region9
    $region8: #{atten_forward.1} parent=1 // pred_region
      %s21 = ssub.s32 32, 32
      %22 = vsyncadd [#allocation4], %s21
      %s24 = sshll.u32 [#allocation3], 4
      %s25 = int_to_ptr.vmem [resolvable:$true] %s24
      %27 = dma.hbm_to_vmem [thread:$0]  %s1, 32, %s25, [#allocation4]
    $region9: #{atten_forward.1} parent=1 // pred_fallthru
      _
    // Predicated region
    $region10: #{atten_forward.1} parent=1 // pred_check
      _
    $region11: #{atten_forward.1} parent=1 // pred_check_branch
      %29 = sbr.rel (0) target = $region13
    $region12: #{atten_forward.1} parent=1 // pred_region
      %s31 = ssub.s32 512, 512
      %32 = vsyncadd [#allocation7], %s31
      %s33 = sshll.u32 [#allocation6], 4
      %s34 = int_to_ptr.vmem [resolvable:$true] %s33
      %39 = dma.hbm_to_vmem [thread:$0]  %s2, 512, %s34, [#allocation7], 128, 128, 8
    $region13: #{atten_forward.1} parent=1 // pred_fallthru
      _
    // Predicated region
    $region14: #{atten_forward.1} parent=1 // pred_check
      _
    $region15: #{atten_forward.1} parent=1 // pred_check_branch
      %41 = sbr.rel (0) target = $region17
    $region16: #{atten_forward.1} parent=1 // pred_region
      _
    $region17: #{atten_forward.1} parent=1 // pred_fallthru
      _
    // Predicated region
    $region18: #{atten_forward.1} parent=1 // pred_check
      _
    $region19: #{atten_forward.1} parent=1 // pred_check_branch
      %43 = sbr.rel (0) target = $region21
    $region20: #{atten_forward.1} parent=1 // pred_region
      %s45 = ssub.s32 512, 512
      %46 = vsyncadd [#allocation7], %s45
      %s47 = sshll.u32 [#allocation8], 4
      %s48 = int_to_ptr.vmem [resolvable:$true] %s47
      %53 = dma.hbm_to_vmem [thread:$0]  %s4, 512, %s48, [#allocation7], 128, 128, 8
    $region21: #{atten_forward.1} parent=1 // pred_fallthru
      _
    // Predicated region
    $region22: #{atten_forward.1} parent=1 // pred_check
      _
    $region23: #{atten_forward.1} parent=1 // pred_check_branch
      %55 = sbr.rel (0) target = $region25
    $region24: #{atten_forward.1} parent=1 // pred_region
      _
    $region25: #{atten_forward.1} parent=1 // pred_fallthru
      _
    // Predicated region
    $region26: #{atten_forward.1} parent=1 // pred_check
      _
    $region27: #{atten_forward.1} parent=1 // pred_check_branch
      %57 = sbr.rel (0) target = $region29
    $region28: #{atten_forward.1} parent=1 // pred_region
      _
    $region29: #{atten_forward.1} parent=1 // pred_fallthru
      _
    // Predicated region
    $region30: #{atten_forward.1} parent=1 // pred_check
      _
    $region31: #{atten_forward.1} parent=1 // pred_check_branch
      %59 = sbr.rel (0) target = $region33
    $region32: #{atten_forward.1} parent=1 // pred_region
      %60 = dma.done [#allocation4], 32
    $region33: #{atten_forward.1} parent=1 // pred_fallthru
      _
    // Predicated region
    $region34: #{atten_forward.1} parent=1 // pred_check
      _
    $region35: #{atten_forward.1} parent=1 // pred_check_branch
      %62 = sbr.rel (0) target = $region37
    $region36: #{atten_forward.1} parent=1 // pred_region
      %63 = dma.done [#allocation7], 512
    $region37: #{atten_forward.1} parent=1 // pred_fallthru
      _
    // Predicated region
    $region38: #{atten_forward.1} parent=1 // pred_check
      _
    $region39: #{atten_forward.1} parent=1 // pred_check_branch
      %65 = sbr.rel (0) target = $region41
    $region40: #{atten_forward.1} parent=1 // pred_region
      %66 = dma.done [#allocation7], 512
    $region41: #{atten_forward.1} parent=1 // pred_fallthru
      _
    %v67 = vld [vmem:[%s0] sm:$0x3]
    %v68 = vld [vmem:[#allocation3] sm:$0x3]
    %v69 = vld [vmem:[#allocation6] sm:$0xff]
    %v70 = vld [vmem:[#allocation6 + $0x8] sm:$0xff]
    %v71 = vld [vmem:[#allocation6 + $0x10] sm:$0xff]
    %v72 = vld [vmem:[#allocation6 + $0x18] sm:$0xff]
    %v73 = vld [vmem:[#allocation8] sm:$0xff]
    %v74 = vld [vmem:[#allocation8 + $0x8] sm:$0xff]
    %v75 = vld [vmem:[#allocation8 + $0x10] sm:$0xff]
    %v76 = vld [vmem:[#allocation8 + $0x18] sm:$0xff]
    %v77 = vld [vmem:[%s3] sm:$0x1]
    %v79 = vlaneseq
    %v80 = vshrl.u32 %v79, 7
    %v81 = vsub.s32 0, %v80
    %v82 = vrot.slane %v77, %v81
    %vm84 = vcmask 261120
    %v86 = vsel %vm84, %v67, 0
    %88 = vmatprep.subr.mxu0 0.0
    %89 = vmatpush1.msra.mxu0 0.0
    %90 = vmatprep.subr.mxu0 0.0
    %91 = vmatpush1.msra.mxu0 0.0
    %92 = vmatprep.subr.mxu0 0.0
    %93 = vmatpush1.msra.mxu0 0.0
    %94 = vmatprep.subr.mxu0 0.0
    %95 = vmatpush1.msra.mxu0 0.0
    %96 = vmatprep.subr.mxu0 0.0
    %97 = vmatpush1.msra.mxu0 0.0
    %98 = vmatprep.subr.mxu0 0.0
    %99 = vmatpush1.msra.mxu0 0.0
    %100 = vmatprep.subr.mxu0 0.0
    %101 = vmatpush1.msra.mxu0 0.0
    %102 = vmatprep.subr.mxu0 0.0
    %103 = vmatpush1.msra.mxu0 0.0
    %104 = vmatprep.subr.mxu0 0.0
    %105 = vmatpush1.msra.mxu0 0.0
    %106 = vmatprep.subr.mxu0 0.0
    %107 = vmatpush1.msra.mxu0 0.0
    %108 = vmatprep.subr.mxu0 0.0
    %109 = vmatpush1.msra.mxu0 0.0
    %110 = vmatprep.subr.mxu0 0.0
    %111 = vmatpush1.msra.mxu0 0.0
    %112 = vmatprep.subr.mxu0 0.0
    %113 = vmatpush1.msra.mxu0 %v72
    %114 = vmatprep.subr.mxu0 0.0
    %115 = vmatpush1.msra.mxu0 %v71
    %116 = vmatprep.subr.mxu0 0.0
    %117 = vmatpush1.msra.mxu0 %v70
    %118 = vmatprep.subr.mxu0 0.0
    %119 = vmatpush1.msra.mxu0 %v69
    %120 = vmatprep.subr.mxu0 0.0
    %121 = vmatpush2.msra.mxu0 0.0
    %122 = vmatprep.subr.mxu0 0.0
    %123 = vmatpush2.msra.mxu0 0.0
    %124 = vmatprep.subr.mxu0 0.0
    %125 = vmatpush2.msra.mxu0 0.0
    %126 = vmatprep.subr.mxu0 0.0
    %127 = vmatpush2.msra.mxu0 0.0
    %128 = vmatprep.subr.mxu0 0.0
    %129 = vmatpush2.msra.mxu0 0.0
    %130 = vmatprep.subr.mxu0 0.0
    %131 = vmatpush2.msra.mxu0 0.0
    %132 = vmatprep.subr.mxu0 0.0
    %133 = vmatpush2.msra.mxu0 0.0
    %134 = vmatprep.subr.mxu0 0.0
    %135 = vmatpush2.msra.mxu0 0.0
    %136 = vmatprep.subr.mxu0 0.0
    %137 = vmatpush2.msra.mxu0 0.0
    %138 = vmatprep.subr.mxu0 0.0
    %139 = vmatpush2.msra.mxu0 0.0
    %140 = vmatprep.subr.mxu0 0.0
    %141 = vmatpush2.msra.mxu0 0.0
    %142 = vmatprep.subr.mxu0 0.0
    %143 = vmatpush2.msra.mxu0 0.0
    %144 = vmatprep.subr.mxu0 0.0
    %145 = vmatpush2.msra.mxu0 0.0
    %146 = vmatprep.subr.mxu0 0.0
    %147 = vmatpush2.msra.mxu0 0.0
    %148 = vmatprep.subr.mxu0 0.0
    %149 = vmatpush2.msra.mxu0 0.0
    %150 = vmatprep.subr.mxu0 0.0
    %151 = vmatpush2.msra.mxu0 0.0
    %152 = vmatprep.mubr.f32.mxu0 0.0
    %153 = vmatmul.mubr.f32.gmra.mxu0 %v86
    %v154 = vpop.f32.mrf.mxu0
    %v155 = vadd.f32 %v82, %v154
    %v156 = vpop.f32.mrf.mxu0
    %157 = vdwg.mxu0
    %v158 = vmax.f32 %v155, 0.0
    %v159 = vld [vmem:[%s5] sm:$0x1]
    %v161 = vlaneseq
    %v162 = vshrl.u32 %v161, 7
    %v163 = vsub.s32 0, %v162
    %v164 = vrot.slane %v159, %v163
    %v167 = vsel %vm84, %v68, 0
    %169 = vmatprep.subr.mxu0 0.0
    %170 = vmatpush1.msra.mxu0 0.0
    %171 = vmatprep.subr.mxu0 0.0
    %172 = vmatpush1.msra.mxu0 0.0
    %173 = vmatprep.subr.mxu0 0.0
    %174 = vmatpush1.msra.mxu0 0.0
    %175 = vmatprep.subr.mxu0 0.0
    %176 = vmatpush1.msra.mxu0 0.0
    %177 = vmatprep.subr.mxu0 0.0
    %178 = vmatpush1.msra.mxu0 0.0
    %179 = vmatprep.subr.mxu0 0.0
    %180 = vmatpush1.msra.mxu0 0.0
    %181 = vmatprep.subr.mxu0 0.0
    %182 = vmatpush1.msra.mxu0 0.0
    %183 = vmatprep.subr.mxu0 0.0
    %184 = vmatpush1.msra.mxu0 0.0
    %185 = vmatprep.subr.mxu0 0.0
    %186 = vmatpush1.msra.mxu0 0.0
    %187 = vmatprep.subr.mxu0 0.0
    %188 = vmatpush1.msra.mxu0 0.0
    %189 = vmatprep.subr.mxu0 0.0
    %190 = vmatpush1.msra.mxu0 0.0
    %191 = vmatprep.subr.mxu0 0.0
    %192 = vmatpush1.msra.mxu0 0.0
    %193 = vmatprep.subr.mxu0 0.0
    %194 = vmatpush1.msra.mxu0 %v76
    %195 = vmatprep.subr.mxu0 0.0
    %196 = vmatpush1.msra.mxu0 %v75
    %197 = vmatprep.subr.mxu0 0.0
    %198 = vmatpush1.msra.mxu0 %v74
    %199 = vmatprep.subr.mxu0 0.0
    %200 = vmatpush1.msra.mxu0 %v73
    %201 = vmatprep.subr.mxu0 0.0
    %202 = vmatpush2.msra.mxu0 0.0
    %203 = vmatprep.subr.mxu0 0.0
    %204 = vmatpush2.msra.mxu0 0.0
    %205 = vmatprep.subr.mxu0 0.0
    %206 = vmatpush2.msra.mxu0 0.0
    %207 = vmatprep.subr.mxu0 0.0
    %208 = vmatpush2.msra.mxu0 0.0
    %209 = vmatprep.subr.mxu0 0.0
    %210 = vmatpush2.msra.mxu0 0.0
    %211 = vmatprep.subr.mxu0 0.0
    %212 = vmatpush2.msra.mxu0 0.0
    %213 = vmatprep.subr.mxu0 0.0
    %214 = vmatpush2.msra.mxu0 0.0
    %215 = vmatprep.subr.mxu0 0.0
    %216 = vmatpush2.msra.mxu0 0.0
    %217 = vmatprep.subr.mxu0 0.0
    %218 = vmatpush2.msra.mxu0 0.0
    %219 = vmatprep.subr.mxu0 0.0
    %220 = vmatpush2.msra.mxu0 0.0
    %221 = vmatprep.subr.mxu0 0.0
    %222 = vmatpush2.msra.mxu0 0.0
    %223 = vmatprep.subr.mxu0 0.0
    %224 = vmatpush2.msra.mxu0 0.0
    %225 = vmatprep.subr.mxu0 0.0
    %226 = vmatpush2.msra.mxu0 0.0
    %227 = vmatprep.subr.mxu0 0.0
    %228 = vmatpush2.msra.mxu0 0.0
    %229 = vmatprep.subr.mxu0 0.0
    %230 = vmatpush2.msra.mxu0 0.0
    %231 = vmatprep.subr.mxu0 0.0
    %232 = vmatpush2.msra.mxu0 0.0
    %233 = vmatprep.mubr.f32.mxu0 0.0
    %234 = vmatmul.mubr.f32.gmra.mxu0 %v167
    %v235 = vpop.f32.mrf.mxu0
    %v236 = vadd.f32 %v164, %v235
    %v237 = vpop.f32.mrf.mxu0
    %238 = vdwg.mxu0
    %v239 = vmax.f32 %v236, 0.0
    %vm240 = vcmask 254976
    %v241 = vsel %vm240, %v158, -inf
    %242 = vmax.xlane.f32.xlu0 %v241
    %v243 = vpop.xlane.xlu0 %242
    %v244 = vsub.f32 %v158, %v243
    %v245 = vlaneseq
    %v246 = vshrl.u32 %v245, 7
    %v247 = vsub.s32 0, %v246
    %v248 = vrot.slane %v244, %v247
    %250 = vbcast.lane.b32.xlu0 %v248, 256
    %v251 = vpop.permute.xlu0 %250
    %s253 = sor.u32 256, 8
    %254 = vbcast.lane.b32.xlu0 %v248, %s253
    %v255 = vpop.permute.xlu0 %254
    %s257 = sor.u32 256, 16
    %258 = vbcast.lane.b32.xlu0 %v248, %s257
    %v259 = vpop.permute.xlu0 %258
    %s261 = sor.u32 256, 24
    %262 = vbcast.lane.b32.xlu0 %v248, %s261
    %v263 = vpop.permute.xlu0 %262
    %v264 = vlaneseq
    %v265 = vshrl.u32 %v264, 7
    %v266 = vsub.s32 1, %v265
    %v267 = vrot.slane %v244, %v266
    %269 = vbcast.lane.b32.xlu0 %v267, 256
    %v270 = vpop.permute.xlu0 %269
    %s272 = sor.u32 256, 8
    %273 = vbcast.lane.b32.xlu0 %v267, %s272
    %v274 = vpop.permute.xlu0 %273
    %s276 = sor.u32 256, 16
    %277 = vbcast.lane.b32.xlu0 %v267, %s276
    %v278 = vpop.permute.xlu0 %277
    %s280 = sor.u32 256, 24
    %281 = vbcast.lane.b32.xlu0 %v267, %s280
    %v282 = vpop.permute.xlu0 %281
    %s283 = sld [smem:[#allocation2]]
    %v286 = vunpack.c.l.s4 1966171168
    %v287 = vunpack.c.0.s8 %v286
    %v288 = vlaneseq
    %v289 = vshrl.u32 %v288, 7
    %v290 = vsub.s32 %v287, %v289
    %v291 = vrot.slane %v239, %v290
    %v292 = vcombine.high %v291, %v291
    %v294 = vunpack.c.l.s4 1966171168
    %v295 = vunpack.c.0.s8 %v294
    %v296 = vlaneseq
    %v297 = vshrl.u32 %v296, 7
    %v298 = vsub.s32 %v295, %v297
    %v299 = vrot.slane %v291, %v298
    %v301 = vunpack.c.l.s4 1966171168
    %v302 = vunpack.c.0.s8 %v301
    %v303 = vlaneseq
    %v304 = vshrl.u32 %v303, 7
    %v305 = vsub.s32 %v302, %v304
    %v306 = vrot.slane %v292, %v305
    %v307 = vlaneseq
    %v308 = vshrl.u32 %v307, 7
    %v309 = vsub.s32 0, %v308
    %v310 = vrot.slane %v299, %v309
    %v311 = vlaneseq
    %v312 = vshrl.u32 %v311, 7
    %v313 = vsub.s32 0, %v312
    %v314 = vrot.slane %v306, %v313
    %v317 = vmul.f32 %v251, %v310
    %v318 = vmul.f32 %v255, %v310
    %v319 = vmul.f32 %v259, %v310
    %v320 = vmul.f32 %v263, %v310
    %v321 = vmul.f32 %v270, %v314
    %v322 = vmul.f32 %v274, %v314
    %v323 = vmul.f32 %v278, %v314
    %v324 = vmul.f32 %v282, %v314
    %v325 = vmul.f32 %v317, 1.442695
    %v326 = vpow.pop %v325
    %v327 = vmul.f32 %v318, 1.442695
    %v328 = vpow.pop %v327
    %v329 = vmul.f32 %v319, 1.442695
    %v330 = vpow.pop %v329
    %v331 = vmul.f32 %v320, 1.442695
    %v332 = vpow.pop %v331
    %v333 = vmul.f32 %v321, 1.442695
    %v334 = vpow.pop %v333
    %v335 = vmul.f32 %v322, 1.442695
    %v336 = vpow.pop %v335
    %v337 = vmul.f32 %v323, 1.442695
    %v338 = vpow.pop %v337
    %v339 = vmul.f32 %v324, 1.442695
    %v340 = vpow.pop %v339
    %v341 = vsel %vm84, %v326, 0.0
    %v342 = vsel %vm84, %v328, 0.0
    %v343 = vadd.f32 %v341, %v342
    %v344 = vsel %vm84, %v330, 0.0
    %v345 = vadd.f32 %v343, %v344
    %v346 = vsel %vm84, %v332, 0.0
    %v347 = vadd.f32 %v345, %v346
    %v348 = vrot.slane %v347, 4
    %v349 = vadd.f32 %v347, %v348
    %v350 = vrot.slane %v349, 2
    %v351 = vadd.f32 %v349, %v350
    %v352 = vrot.slane %v351, 1
    %v353 = vadd.f32 %v351, %v352
    %v354 = vsel %vm84, %v334, 0.0
    %v355 = vsel %vm84, %v336, 0.0
    %v356 = vadd.f32 %v354, %v355
    %v357 = vsel %vm84, %v338, 0.0
    %v358 = vadd.f32 %v356, %v357
    %v359 = vsel %vm84, %v340, 0.0
    %v360 = vadd.f32 %v358, %v359
    %v361 = vrot.slane %v360, 4
    %v362 = vadd.f32 %v360, %v361
    %v363 = vrot.slane %v362, 2
    %v364 = vadd.f32 %v362, %v363
    %v365 = vrot.slane %v364, 1
    %v366 = vadd.f32 %v364, %v365
    %v367 = vstv %s283
    %v368 = vrcp.pop %v353
    %v369 = vmul.f32 %v367, %v368
    %v370 = vrcp.pop %v366
    %v371 = vmul.f32 %v367, %v370
    %vm374 = vcmask 1041409
    %v375 = vsel %vm374, %v371, %v369
    %376 = vrot.lane.b32.xlu0 %v375, 32
    %v377 = vpop.permute.xlu0 %376
    %v379 = vmul.f32 %v239, %v377
    %v382 = vunpack.c.l.s4 1966171168
    %v383 = vunpack.c.0.s8 %v382
    %v384 = vlaneseq
    %v385 = vshrl.u32 %v384, 7
    %v386 = vsub.s32 %v383, %v385
    %v387 = vrot.slane %v379, %v386
    %v388 = vcombine.high %v387, %v387
    %v390 = vunpack.c.l.s4 1966171168
    %v391 = vunpack.c.0.s8 %v390
    %v392 = vlaneseq
    %v393 = vshrl.u32 %v392, 7
    %v394 = vsub.s32 %v391, %v393
    %v395 = vrot.slane %v387, %v394
    %v397 = vunpack.c.l.s4 1966171168
    %v398 = vunpack.c.0.s8 %v397
    %v399 = vlaneseq
    %v400 = vshrl.u32 %v399, 7
    %v401 = vsub.s32 %v398, %v400
    %v402 = vrot.slane %v388, %v401
    %v403 = vlaneseq
    %v404 = vshrl.u32 %v403, 7
    %v405 = vsub.s32 0, %v404
    %v406 = vrot.slane %v395, %v405
    %v407 = vlaneseq
    %v408 = vshrl.u32 %v407, 7
    %v409 = vsub.s32 0, %v408
    %v410 = vrot.slane %v402, %v409
    %411 = vrot.lane.b32.xlu0 %v406, 96
    %v412 = vpop.permute.xlu0 %411
    %413 = vrot.lane.b32.xlu0 %v410, 96
    %v414 = vpop.permute.xlu0 %413
    %v417 = vmul.f32 %v326, %v412
    %v418 = vmul.f32 %v328, %v412
    %v419 = vmul.f32 %v330, %v412
    %v420 = vmul.f32 %v332, %v412
    %v421 = vmul.f32 %v334, %v414
    %v422 = vmul.f32 %v336, %v414
    %v423 = vmul.f32 %v338, %v414
    %v424 = vmul.f32 %v340, %v414
    %v425 = vsel %vm84, %v417, 0.0
    %426 = vadd.xlane.f32.xlu0 %v425
    %v427 = vpop.xlane.xlu0 %426
    %v428 = vsel %vm84, %v418, 0.0
    %429 = vadd.xlane.f32.xlu0 %v428
    %v430 = vpop.xlane.xlu0 %429
    %v431 = vsel %vm84, %v419, 0.0
    %432 = vadd.xlane.f32.xlu0 %v431
    %v433 = vpop.xlane.xlu0 %432
    %v434 = vsel %vm84, %v420, 0.0
    %435 = vadd.xlane.f32.xlu0 %v434
    %v436 = vpop.xlane.xlu0 %435
    %v437 = vsel %vm84, %v421, 0.0
    %438 = vadd.xlane.f32.xlu0 %v437
    %v439 = vpop.xlane.xlu0 %438
    %v440 = vsel %vm84, %v422, 0.0
    %441 = vadd.xlane.f32.xlu0 %v440
    %v442 = vpop.xlane.xlu0 %441
    %v443 = vsel %vm84, %v423, 0.0
    %444 = vadd.xlane.f32.xlu0 %v443
    %v445 = vpop.xlane.xlu0 %444
    %v446 = vsel %vm84, %v424, 0.0
    %447 = vadd.xlane.f32.xlu0 %v446
    %v448 = vpop.xlane.xlu0 %447
    %v457 = vlaneseq
    %v458 = vand.u32 %v457, 127
    %v459 = vlaneseq
    %v460 = vshrl.u32 %v459, 7
    %v461 = vsub.s32 %v458, %v460
    %v462 = vrot.slane %v427, %v461
    %v463 = vadd.s32 %v458, 4294967288
    %v464 = vlaneseq
    %v465 = vshrl.u32 %v464, 7
    %v466 = vsub.s32 %v463, %v465
    %v467 = vrot.slane %v430, %v466
    %vm468 = vcmask 130112
    %v469 = vsel %vm468, %v467, %v462
    %v470 = vadd.s32 %v458, 4294967280
    %v471 = vlaneseq
    %v472 = vshrl.u32 %v471, 7
    %v473 = vsub.s32 %v470, %v472
    %v474 = vrot.slane %v433, %v473
    %vm475 = vcmask 195712
    %v476 = vsel %vm475, %v474, %v469
    %v477 = vadd.s32 %v458, 4294967272
    %v478 = vlaneseq
    %v479 = vshrl.u32 %v478, 7
    %v480 = vsub.s32 %v477, %v479
    %v481 = vrot.slane %v436, %v480
    %vm482 = vcmask 261312
    %v483 = vsel %vm482, %v481, %v476
    %v484 = vlaneseq
    %v485 = vshrl.u32 %v484, 7
    %v486 = vsub.s32 %v458, %v485
    %v487 = vrot.slane %v439, %v486
    %v488 = vlaneseq
    %v489 = vshrl.u32 %v488, 7
    %v490 = vsub.s32 %v463, %v489
    %v491 = vrot.slane %v442, %v490
    %v492 = vsel %vm468, %v491, %v487
    %v493 = vlaneseq
    %v494 = vshrl.u32 %v493, 7
    %v495 = vsub.s32 %v470, %v494
    %v496 = vrot.slane %v445, %v495
    %v497 = vsel %vm475, %v496, %v492
    %v498 = vlaneseq
    %v499 = vshrl.u32 %v498, 7
    %v500 = vsub.s32 %v477, %v499
    %v501 = vrot.slane %v448, %v500
    %v502 = vsel %vm482, %v501, %v497
    %v503 = vsel %vm374, %v502, %v483
    %505 = vst.msk [vmem:[#allocation9] sm:$0x3] %vm240, %v503
    // Predicated region
    $region42: #{atten_forward.1} parent=1 // pred_check
      _
    $region43: #{atten_forward.1} parent=1 // pred_check_branch
      %507 = sbr.rel (0) target = $region45
    $region44: #{atten_forward.1} parent=1 // pred_region
      %s509 = ssub.s32 32, 32
      %510 = vsyncadd [#allocation5], %s509
      %s512 = sshll.u32 [#allocation9], 4
      %s513 = int_to_ptr.vmem [resolvable:$true] %s512
      %515 = dma.vmem_to_hbm [thread:$0]  %s513, 32, %s7, [#allocation5]
    $region45: #{atten_forward.1} parent=1 // pred_fallthru
      _
    // Predicated region
    $region46: #{atten_forward.1} parent=1 // pred_check
      _
    $region47: #{atten_forward.1} parent=1 // pred_check_branch
      %517 = sbr.rel (0) target = $region49
    $region48: #{atten_forward.1} parent=1 // pred_region
      %518 = dma.done [#allocation5], 32
    $region49: #{atten_forward.1} parent=1 // pred_fallthru
      _
    %519 = vsyncpa [#allocation4], 1
    %520 = vsyncpa [#allocation7], 1
    %521 = vsyncpa [#allocation5], 1

</llo_original>
